<compile_context>
chip_gen: v6e
topology: v6e:2x2x1
jax: 0.10.0
libtpu: 0.0.40
codegen_flags: <defaults>
</compile_context>

<pallas_src>
import functools

import jax
import jax.numpy as jnp
from jax.experimental import pallas as pl
from jax.experimental.pallas import tpu as pltpu

LANE = 128
SUBLANE = 8


def _round_up(v, m):
    return (v + m - 1) // m * m


def _sigmoid(s):
    # Single EUP transcendental (tanh) instead of exp + divide.
    return 0.5 * jnp.tanh(0.5 * s) + 0.5


def _fnn_kernel(n1, x_ref, w1_ref, b1_ref, w2_ref, b2_ref,
                w3_ref, b3_ref, w4_ref, b4_ref, out_ref):
    x = x_ref[...]                                                   # (tm, node)

    # fc1 + sigmoid -> h (real columns are lanes [0, n1) of the output slab)
    h = _sigmoid(jnp.dot(x, w1_ref[...], preferred_element_type=jnp.float32)
                 + b1_ref[...])                                      # (tm, slab_w)

    # fc2 + sigmoid  (padded rows of w2 are zero, so h's pad lanes are inert)
    z = _sigmoid(jnp.dot(h, w2_ref[...], preferred_element_type=jnp.float32)
                 + b2_ref[...])

    # fc3 + sigmoid
    z = _sigmoid(jnp.dot(z, w3_ref[...], preferred_element_type=jnp.float32)
                 + b3_ref[...])

    # fc4 (no activation).  w4/b4 were padded so the real y columns already
    # land at lanes [y_start, y_start+n4) of the shared slab; other lanes = 0.
    y = jnp.dot(z, w4_ref[...], preferred_element_type=jnp.float32) + b4_ref[...]

    # Merge h and y into one lane-dense slab: h in lanes [0, n1), y elsewhere.
    col = jax.lax.broadcasted_iota(jnp.int32, out_ref.shape, 1)
    out_ref[...] = jnp.where(col < n1, h, y).astype(out_ref.dtype)


def _pad_params_merged(params, y_start, slab_w):
    """Zero-pad each layer so matmul N (and the next layer's K) is a multiple
    of 128 lanes, and place fc4's columns at [y_start, y_start+n4) of the
    shared h/y output slab.  Exact: padded weight rows/cols and biases are 0,
    so padded activation lanes never touch the real outputs."""
    w1, b1 = params["w1"], params["b1"]
    w2, b2 = params["w2"], params["b2"]
    w3, b3 = params["w3"], params["b3"]
    w4, b4 = params["w4"], params["b4"]
    node, n1 = w1.shape
    n2, n3, n4 = w2.shape[1], w3.shape[1], w4.shape[1]
    n2p, n3p = _round_up(n2, LANE), _round_up(n3, LANE)

    p = {}
    p["w1"] = jnp.zeros((node, slab_w), w1.dtype).at[:, :n1].set(w1)
    p["b1"] = jnp.zeros((1, slab_w), b1.dtype).at[:, :n1].set(b1)
    p["w2"] = jnp.zeros((slab_w, n2p), w2.dtype).at[:n1, :n2].set(w2)
    p["b2"] = jnp.zeros((1, n2p), b2.dtype).at[:, :n2].set(b2)
    p["w3"] = jnp.zeros((n2p, n3p), w3.dtype).at[:n2, :n3].set(w3)
    p["b3"] = jnp.zeros((1, n3p), b3.dtype).at[:, :n3].set(b3)
    p["w4"] = jnp.zeros((n3p, slab_w), w4.dtype).at[:n3, y_start:y_start + n4].set(w4)
    p["b4"] = jnp.zeros((1, slab_w), b4.dtype).at[:, y_start:y_start + n4].set(b4)
    return p


def _pick_tm(batch):
    """Batch-tile size: big tiles to amortize per-step overhead, but >= 2 grid
    steps once batch >= 256 so v7x's two TensorCores both get work."""
    if batch < 256:
        return _round_up(batch, SUBLANE)          # tiny: one full-extent tile
    target = 1024 if batch >= 4096 else 512
    n_tiles = max(2, pl.cdiv(batch, target))
    return _round_up(pl.cdiv(batch, n_tiles), SUBLANE)


@functools.partial(jax.jit, static_argnames=("t",))
def fnn_forward(x, params, t):
    """x: (batch, t*node) float32; params: (in,out) weights / (1,out) biases."""
    batch = x.shape[0]
    node = x.shape[1] // t
    n1 = params["w1"].shape[1]
    n4 = params["w4"].shape[1]

    # y shares h's output slab: if its n4 real columns fit inside h's lane
    # padding they start right after h's n1 columns, otherwise at the next
    # 128-lane boundary.  Either way: one lane-dense output per row.
    y_start = n1 if (n1 + n4) <= _round_up(n1, LANE) else _round_up(n1, LANE)
    slab_w = _round_up(y_start + n4, LANE)

    padded = _pad_params_merged(params, y_start, slab_w)
    n2p = padded["w2"].shape[1]
    n3p = padded["w3"].shape[1]

    # Only the last time step is used by the model.  allow_input_fusion lets
    # XLA fuse this slice (and the batch pad below) into the kernel's input
    # DMA instead of materializing an extra HBM copy.
    x_last = x.reshape(batch, t, node)[:, -1, :]                     # (batch, node)

    tm = _pick_tm(batch)
    batch_p = _round_up(batch, tm)
    if batch_p != batch:
        x_last = jnp.pad(x_last, ((0, batch_p - batch), (0, 0)))
    grid = (batch_p // tm,)

    def streamed(shape):              # new block per batch tile
        return pl.BlockSpec(shape, lambda i: (i, 0))

    def resident(shape):              # same block every step -> stays in VMEM
        return pl.BlockSpec(shape, lambda i: (0, 0))

    in_specs = [
        streamed((tm, node)),
        resident(padded["w1"].shape), resident(padded["b1"].shape),
        resident(padded["w2"].shape), resident(padded["b2"].shape),
        resident(padded["w3"].shape), resident(padded["b3"].shape),
        resident(padded["w4"].shape), resident(padded["b4"].shape),
    ]
    out_spec = streamed((tm, slab_w))
    out_shape = jax.ShapeDtypeStruct((batch_p, slab_w), jnp.float32)

    # Advisory cost hint (post-merge traffic) so XLA schedules neighbors well.
    param_elems = sum(int(v.size) for v in padded.values())
    flops = 2 * batch_p * (node * slab_w + slab_w * n2p + n2p * n3p + n3p * slab_w)
    transcendentals = batch_p * (slab_w + n2p + n3p)
    bytes_accessed = 4 * (batch_p * node + param_elems + batch_p * slab_w)
    cost = pl.CostEstimate(flops=flops, transcendentals=transcendentals,
                           bytes_accessed=bytes_accessed)

    out = pl.pallas_call(
        functools.partial(_fnn_kernel, n1),
        grid=grid,
        in_specs=in_specs,
        out_specs=out_spec,
        out_shape=out_shape,
        compiler_params=pltpu.CompilerParams(
            dimension_semantics=("parallel",),
            allow_input_fusion=[True] + [False] * 8),
        cost_estimate=cost,
    )(x_last,
      padded["w1"], padded["b1"],
      padded["w2"], padded["b2"],
      padded["w3"], padded["b3"],
      padded["w4"], padded["b4"])

    # Slicing contract: padded lanes / padded batch rows of `out` are junk and
    # MUST be sliced off here (PyTorch returns (h, y.reshape(batch, -1))).
    h = out[:batch, :n1]
    y = out[:batch, y_start:y_start + n4]
    return h, y


def init_params(key, input_num, transmission_num, output_num):
    """Deterministic synthetic init (shapes match the FNN nn.Linear layers)."""
    dims = [
        ("1", input_num, transmission_num),
        ("2", transmission_num, output_num * 16),
        ("3", output_num * 16, output_num * 4),
        ("4", output_num * 4, output_num),
    ]
    params = {}
    for name, fan_in, fan_out in dims:
        key, kw, kb = jax.random.split(key, 3)
        bound = 1.0 / (fan_in ** 0.5)
        params[f"w{name}"] = jax.random.uniform(
            kw, (fan_in, fan_out), jnp.float32, -bound, bound)
        params[f"b{name}"] = jax.random.uniform(
            kb, (1, fan_out), jnp.float32, -bound, bound)
    return params


def _ref_forward(x, params, t):
    """Plain-JAX reference (highest-precision matmuls) matching the module."""
    batch = x.shape[0]
    node = x.shape[1] // t
    hp = jax.lax.Precision.HIGHEST
    xl = x.reshape(batch, t, node)[:, -1, :]
    h = jax.nn.sigmoid(jnp.dot(xl, params["w1"], precision=hp) + params["b1"])
    z = jax.nn.sigmoid(jnp.dot(h, params["w2"], precision=hp) + params["b2"])
    z = jax.nn.sigmoid(jnp.dot(z, params["w3"], precision=hp) + params["b3"])
    y = jnp.dot(z, params["w4"], precision=hp) + params["b4"]
    return h, y


if __name__ == "__main__":
    # Small shapes consistent with the module's forward.
    batch = 2
    t = 4
    input_num = 32            # "node" dimension fed to fc1
    transmission_num = 64
    output_num = 8            # fc2: 128, fc3: 32, fc4: 8

    key = jax.random.PRNGKey(0)
    key, kx = jax.random.split(key)
    x = jax.random.normal(kx, (batch, t * input_num), jnp.float32)
    params = init_params(key, input_num, transmission_num, output_num)

    h, y = fnn_forward(x, params, t)
    jax.block_until_ready((h, y))

    h_ref, y_ref = _ref_forward(x, params, t)
    assert h.shape == (batch, transmission_num) and y.shape == (batch, output_num)
    # tanh-form sigmoid / MXU f32 accumulation change low-order bits only.
    assert jnp.allclose(h, h_ref, atol=1e-4), "h mismatch"
    assert jnp.allclose(y, y_ref, atol=1e-4), "y mismatch"

    print("KERNEL_OK")
</pallas_src>

<mosaic_0001>
module attributes {stable_mosaic.version = 11 : i64} {
  func.func @_fnn_kernel(%arg0: i32, %arg1: memref<8x32xf32, #tpu.memory_space<vmem>>, %arg2: memref<32x128xf32, #tpu.memory_space<vmem>>, %arg3: memref<1x128xf32, #tpu.memory_space<vmem>>, %arg4: memref<128x128xf32, #tpu.memory_space<vmem>>, %arg5: memref<1x128xf32, #tpu.memory_space<vmem>>, %arg6: memref<128x128xf32, #tpu.memory_space<vmem>>, %arg7: memref<1x128xf32, #tpu.memory_space<vmem>>, %arg8: memref<128x128xf32, #tpu.memory_space<vmem>>, %arg9: memref<1x128xf32, #tpu.memory_space<vmem>>, %arg10: memref<8x128xf32, #tpu.memory_space<vmem>>) attributes {dimension_semantics = [#tpu.dimension_semantics<parallel>], iteration_bounds = array<i64: 1>, scalar_prefetch = 0 : i64, scratch_operands = 0 : i64, tpu.core_type = #tpu.core_type<tc>, window_params = [{transform_indices = @transform_0, window_bounds = array<i64: 8, 32>}, {pipeline_mode = #tpu.pipeline_mode<synchronous>, transform_indices = @transform_1, window_bounds = array<i64: 32, 128>}, {pipeline_mode = #tpu.pipeline_mode<synchronous>, transform_indices = @transform_2, window_bounds = array<i64: 1, 128>}, {pipeline_mode = #tpu.pipeline_mode<synchronous>, transform_indices = @transform_3, window_bounds = array<i64: 128, 128>}, {pipeline_mode = #tpu.pipeline_mode<synchronous>, transform_indices = @transform_4, window_bounds = array<i64: 1, 128>}, {pipeline_mode = #tpu.pipeline_mode<synchronous>, transform_indices = @transform_5, window_bounds = array<i64: 128, 128>}, {pipeline_mode = #tpu.pipeline_mode<synchronous>, transform_indices = @transform_6, window_bounds = array<i64: 1, 128>}, {pipeline_mode = #tpu.pipeline_mode<synchronous>, transform_indices = @transform_7, window_bounds = array<i64: 128, 128>}, {pipeline_mode = #tpu.pipeline_mode<synchronous>, transform_indices = @transform_8, window_bounds = array<i64: 1, 128>}, {transform_indices = @transform_9, window_bounds = array<i64: 8, 128>}]} {
    %c0 = arith.constant 0 : index
    %c0_0 = arith.constant 0 : index
    %0 = vector.load %arg1[%c0, %c0_0] : memref<8x32xf32, #tpu.memory_space<vmem>>, vector<8x32xf32>
    %c0_1 = arith.constant 0 : index
    %c0_2 = arith.constant 0 : index
    %1 = vector.load %arg2[%c0_1, %c0_2] : memref<32x128xf32, #tpu.memory_space<vmem>>, vector<32x128xf32>
    %cst = arith.constant dense<0.000000e+00> : vector<8x128xf32>
    %2 = tpu.matmul %0, %1, %cst {dimension_numbers = #tpu.dot_dimension_numbers<[1], [0], [0], [1], [0, 0, 1, 1], [], []>} : vector<8x32xf32>, vector<32x128xf32>, vector<8x128xf32> -> vector<8x128xf32>
    %c0_3 = arith.constant 0 : index
    %c0_4 = arith.constant 0 : index
    %3 = vector.load %arg3[%c0_3, %c0_4] : memref<1x128xf32, #tpu.memory_space<vmem>>, vector<1x128xf32>
    %4 = vector.broadcast %3 : vector<1x128xf32> to vector<8x128xf32>
    %5 = arith.addf %2, %4 : vector<8x128xf32>
    %cst_5 = arith.constant 5.000000e-01 : f32
    %6 = vector.broadcast %cst_5 : f32 to vector<8x128xf32>
    %7 = arith.mulf %6, %5 : vector<8x128xf32>
    %8 = math.tanh %7 : vector<8x128xf32>
    %cst_6 = arith.constant 5.000000e-01 : f32
    %9 = vector.broadcast %cst_6 : f32 to vector<8x128xf32>
    %10 = arith.mulf %9, %8 : vector<8x128xf32>
    %cst_7 = arith.constant 5.000000e-01 : f32
    %11 = vector.broadcast %cst_7 : f32 to vector<8x128xf32>
    %12 = arith.addf %10, %11 : vector<8x128xf32>
    %c0_8 = arith.constant 0 : index
    %c0_9 = arith.constant 0 : index
    %13 = vector.load %arg4[%c0_8, %c0_9] : memref<128x128xf32, #tpu.memory_space<vmem>>, vector<128x128xf32>
    %cst_10 = arith.constant dense<0.000000e+00> : vector<8x128xf32>
    %14 = tpu.matmul %12, %13, %cst_10 {dimension_numbers = #tpu.dot_dimension_numbers<[1], [0], [0], [1], [0, 0, 1, 1], [], []>} : vector<8x128xf32>, vector<128x128xf32>, vector<8x128xf32> -> vector<8x128xf32>
    %c0_11 = arith.constant 0 : index
    %c0_12 = arith.constant 0 : index
    %15 = vector.load %arg5[%c0_11, %c0_12] : memref<1x128xf32, #tpu.memory_space<vmem>>, vector<1x128xf32>
    %16 = vector.broadcast %15 : vector<1x128xf32> to vector<8x128xf32>
    %17 = arith.addf %14, %16 : vector<8x128xf32>
    %cst_13 = arith.constant 5.000000e-01 : f32
    %18 = vector.broadcast %cst_13 : f32 to vector<8x128xf32>
    %19 = arith.mulf %18, %17 : vector<8x128xf32>
    %20 = math.tanh %19 : vector<8x128xf32>
    %cst_14 = arith.constant 5.000000e-01 : f32
    %21 = vector.broadcast %cst_14 : f32 to vector<8x128xf32>
    %22 = arith.mulf %21, %20 : vector<8x128xf32>
    %cst_15 = arith.constant 5.000000e-01 : f32
    %23 = vector.broadcast %cst_15 : f32 to vector<8x128xf32>
    %24 = arith.addf %22, %23 : vector<8x128xf32>
    %c0_16 = arith.constant 0 : index
    %c0_17 = arith.constant 0 : index
    %25 = vector.load %arg6[%c0_16, %c0_17] : memref<128x128xf32, #tpu.memory_space<vmem>>, vector<128x128xf32>
    %cst_18 = arith.constant dense<0.000000e+00> : vector<8x128xf32>
    %26 = tpu.matmul %24, %25, %cst_18 {dimension_numbers = #tpu.dot_dimension_numbers<[1], [0], [0], [1], [0, 0, 1, 1], [], []>} : vector<8x128xf32>, vector<128x128xf32>, vector<8x128xf32> -> vector<8x128xf32>
    %c0_19 = arith.constant 0 : index
    %c0_20 = arith.constant 0 : index
    %27 = vector.load %arg7[%c0_19, %c0_20] : memref<1x128xf32, #tpu.memory_space<vmem>>, vector<1x128xf32>
    %28 = vector.broadcast %27 : vector<1x128xf32> to vector<8x128xf32>
    %29 = arith.addf %26, %28 : vector<8x128xf32>
    %cst_21 = arith.constant 5.000000e-01 : f32
    %30 = vector.broadcast %cst_21 : f32 to vector<8x128xf32>
    %31 = arith.mulf %30, %29 : vector<8x128xf32>
    %32 = math.tanh %31 : vector<8x128xf32>
    %cst_22 = arith.constant 5.000000e-01 : f32
    %33 = vector.broadcast %cst_22 : f32 to vector<8x128xf32>
    %34 = arith.mulf %33, %32 : vector<8x128xf32>
    %cst_23 = arith.constant 5.000000e-01 : f32
    %35 = vector.broadcast %cst_23 : f32 to vector<8x128xf32>
    %36 = arith.addf %34, %35 : vector<8x128xf32>
    %c0_24 = arith.constant 0 : index
    %c0_25 = arith.constant 0 : index
    %37 = vector.load %arg8[%c0_24, %c0_25] : memref<128x128xf32, #tpu.memory_space<vmem>>, vector<128x128xf32>
    %cst_26 = arith.constant dense<0.000000e+00> : vector<8x128xf32>
    %38 = tpu.matmul %36, %37, %cst_26 {dimension_numbers = #tpu.dot_dimension_numbers<[1], [0], [0], [1], [0, 0, 1, 1], [], []>} : vector<8x128xf32>, vector<128x128xf32>, vector<8x128xf32> -> vector<8x128xf32>
    %c0_27 = arith.constant 0 : index
    %c0_28 = arith.constant 0 : index
    %39 = vector.load %arg9[%c0_27, %c0_28] : memref<1x128xf32, #tpu.memory_space<vmem>>, vector<1x128xf32>
    %40 = vector.broadcast %39 : vector<1x128xf32> to vector<8x128xf32>
    %41 = arith.addf %38, %40 : vector<8x128xf32>
    %42 = tpu.iota {dimensions = array<i32: 1>} : vector<8x128xi32>
    %c64_i32 = arith.constant 64 : i32
    %43 = vector.broadcast %c64_i32 : i32 to vector<8x128xi32>
    %44 = arith.cmpi slt, %42, %43 : vector<8x128xi32>
    %45 = arith.select %44, %12, %41 : vector<8x128xi1>, vector<8x128xf32>
    %c0_29 = arith.constant 0 : index
    %c0_30 = arith.constant 0 : index
    %46 = vector.load %arg10[%c0_29, %c0_30] : memref<8x128xf32, #tpu.memory_space<vmem>>, vector<8x128xf32>
    tpu.vector_store %arg10[%c0_29, %c0_30], %45 {strides = array<i32>} : memref<8x128xf32, #tpu.memory_space<vmem>>, vector<8x128xf32>,
    return
  }
  func.func @transform_0(%arg0: i32) -> (i32, i32) {
    %c0_i32 = arith.constant 0 : i32
    %c0_i32_0 = arith.constant 0 : i32
    return %arg0, %c0_i32 : i32, i32
  }
  func.func @transform_1(%arg0: i32) -> (i32, i32) {
    %c0_i32 = arith.constant 0 : i32
    %c0_i32_0 = arith.constant 0 : i32
    %c0_i32_1 = arith.constant 0 : i32
    return %c0_i32, %c0_i32_0 : i32, i32
  }
  func.func @transform_2(%arg0: i32) -> (i32, i32) {
    %c0_i32 = arith.constant 0 : i32
    %c0_i32_0 = arith.constant 0 : i32
    %c0_i32_1 = arith.constant 0 : i32
    return %c0_i32, %c0_i32_0 : i32, i32
  }
  func.func @transform_3(%arg0: i32) -> (i32, i32) {
    %c0_i32 = arith.constant 0 : i32
    %c0_i32_0 = arith.constant 0 : i32
    %c0_i32_1 = arith.constant 0 : i32
    return %c0_i32, %c0_i32_0 : i32, i32
  }
  func.func @transform_4(%arg0: i32) -> (i32, i32) {
    %c0_i32 = arith.constant 0 : i32
    %c0_i32_0 = arith.constant 0 : i32
    %c0_i32_1 = arith.constant 0 : i32
    return %c0_i32, %c0_i32_0 : i32, i32
  }
  func.func @transform_5(%arg0: i32) -> (i32, i32) {
    %c0_i32 = arith.constant 0 : i32
    %c0_i32_0 = arith.constant 0 : i32
    %c0_i32_1 = arith.constant 0 : i32
    return %c0_i32, %c0_i32_0 : i32, i32
  }
  func.func @transform_6(%arg0: i32) -> (i32, i32) {
    %c0_i32 = arith.constant 0 : i32
    %c0_i32_0 = arith.constant 0 : i32
    %c0_i32_1 = arith.constant 0 : i32
    return %c0_i32, %c0_i32_0 : i32, i32
  }
  func.func @transform_7(%arg0: i32) -> (i32, i32) {
    %c0_i32 = arith.constant 0 : i32
    %c0_i32_0 = arith.constant 0 : i32
    %c0_i32_1 = arith.constant 0 : i32
    return %c0_i32, %c0_i32_0 : i32, i32
  }
  func.func @transform_8(%arg0: i32) -> (i32, i32) {
    %c0_i32 = arith.constant 0 : i32
    %c0_i32_0 = arith.constant 0 : i32
    %c0_i32_1 = arith.constant 0 : i32
    return %c0_i32, %c0_i32_0 : i32, i32
  }
  func.func @transform_9(%arg0: i32) -> (i32, i32) {
    %c0_i32 = arith.constant 0 : i32
    %c0_i32_0 = arith.constant 0 : i32
    return %arg0, %c0_i32 : i32, i32
  }
}

</mosaic_0001>

<llo_original>
// kernel: fnn_forward.2
$region0: #{fnn_forward.2}
  #allocation0 [shape = 'u32[]', space=smem, size = 0x4, offset = 0x4, fixed_abs, tag = 'smem constant byte address 0x4 - core index']
  #allocation1 [shape = 'u32[144,128]{1,0:T(1,128)}', space=vmem, size = 0x12000, scoped, tag = 'internal scratch']
  #allocation2 [shape = 'u32[2048]{0}', space=vmem, size = 0x2000, scoped, tag = 'scoped memory for fnn_forward.2']
  #allocation3 [shape = 'u32[2048]{0}', space=vmem, size = 0x2000, scoped, tag = 'scoped memory for fnn_forward.2']
  #allocation4 [shape = 'u32[2048]{0}', space=vmem, size = 0x2000, scoped, tag = 'scoped memory for fnn_forward.2']
  #allocation5 [shape = 'u32[2048]{0}', space=vmem, size = 0x2000, scoped, tag = 'scoped memory for fnn_forward.2']
  #allocation6 [shape = 'u32[2048]{0}', space=vmem, size = 0x2000, scoped, tag = 'scoped memory for fnn_forward.2']
  %s0 = inlined_call_operand.vmem [shape: f32[32,128], index: 0, kind: input, shape index: {}]
  %s1 = inlined_call_operand.vmem [shape: f32[1,128], index: 1, kind: input, shape index: {}]
  %s2 = inlined_call_operand.vmem [shape: f32[128,128], index: 2, kind: input, shape index: {}]
  %s3 = inlined_call_operand.vmem [shape: f32[1,128], index: 3, kind: input, shape index: {}]
  %s4 = inlined_call_operand.vmem [shape: f32[128,128], index: 4, kind: input, shape index: {}]
  %s5 = inlined_call_operand.vmem [shape: f32[1,128], index: 5, kind: input, shape index: {}]
  %s6 = inlined_call_operand.vmem [shape: f32[128,128], index: 6, kind: input, shape index: {}]
  %s7 = inlined_call_operand.vmem [shape: f32[1,128], index: 7, kind: input, shape index: {}]
  %s8 = inlined_call_operand.vmem [shape: f32[2,32], index: 8, kind: input, shape index: {}]
  %s9 = inlined_call_operand.<no memory space> [shape: f32[], index: 9, kind: input, shape index: {}]
  %s10 = inlined_call_operand.vmem [shape: f32[8,128], index: 10, kind: output, shape index: {}]
  %s11 = sld [smem:[#allocation0]]
  $region46: #{fnn_forward.2} parent=0
    _
  %s13 = ssub.s32 1, %s11
  %s14 = scalar_select 0, %s13, %s11
  %v15 = vstv %s9
  $region1: #{fnn_forward.2} parent=0
    #allocation7 [shape = 'u8[4096]{0}', space=vmem, size = 0x1000, dematerialized = true, scoped, tag = 'FusionAdapter Buffer %fusion.1 = f32[8,32]{1,0:T(8,128)} fusion(%param_8.1, %param_9), kind=kLoop, calls=%fused_computation.4.clone, metadata={op_name="jit(fnn_forward)/jit(_pad)/pad" stack_frame_id=17}']
    // Predicated region
    $region2: #{fnn_forward.2} parent=1 // pred_check
      _
    $region3: #{fnn_forward.2} parent=1 // pred_check_branch
      %17 = sbr.rel (0) target = $region5
    $region4: #{fnn_forward.2} parent=1 // pred_region
      _
    $region5: #{fnn_forward.2} parent=1 // pred_fallthru
      _
    // Predicated region
    $region6: #{fnn_forward.2} parent=1 // pred_check
      _
    $region7: #{fnn_forward.2} parent=1 // pred_check_branch
      %19 = sbr.rel (0) target = $region9
    $region8: #{fnn_forward.2} parent=1 // pred_region
      _
    $region9: #{fnn_forward.2} parent=1 // pred_fallthru
      _
    // Predicated region
    $region10: #{fnn_forward.2} parent=1 // pred_check
      _
    $region11: #{fnn_forward.2} parent=1 // pred_check_branch
      %21 = sbr.rel (0) target = $region13
    $region12: #{fnn_forward.2} parent=1 // pred_region
      _
    $region13: #{fnn_forward.2} parent=1 // pred_fallthru
      _
    // Predicated region
    $region14: #{fnn_forward.2} parent=1 // pred_check
      _
    $region15: #{fnn_forward.2} parent=1 // pred_check_branch
      %23 = sbr.rel (0) target = $region17
    $region16: #{fnn_forward.2} parent=1 // pred_region
      _
    $region17: #{fnn_forward.2} parent=1 // pred_fallthru
      _
    // Predicated region
    $region18: #{fnn_forward.2} parent=1 // pred_check
      _
    $region19: #{fnn_forward.2} parent=1 // pred_check_branch
      %25 = sbr.rel (0) target = $region21
    $region20: #{fnn_forward.2} parent=1 // pred_region
      _
    $region21: #{fnn_forward.2} parent=1 // pred_fallthru
      _
    // Predicated region
    $region22: #{fnn_forward.2} parent=1 // pred_check
      _
    $region23: #{fnn_forward.2} parent=1 // pred_check_branch
      %27 = sbr.rel (0) target = $region25
    $region24: #{fnn_forward.2} parent=1 // pred_region
      _
    $region25: #{fnn_forward.2} parent=1 // pred_fallthru
      _
    // Predicated region
    $region26: #{fnn_forward.2} parent=1 // pred_check
      _
    $region27: #{fnn_forward.2} parent=1 // pred_check_branch
      %29 = sbr.rel (0) target = $region29
    $region28: #{fnn_forward.2} parent=1 // pred_region
      _
    $region29: #{fnn_forward.2} parent=1 // pred_fallthru
      _
    // Predicated region
    $region30: #{fnn_forward.2} parent=1 // pred_check
      _
    $region31: #{fnn_forward.2} parent=1 // pred_check_branch
      %31 = sbr.rel (0) target = $region33
    $region32: #{fnn_forward.2} parent=1 // pred_region
      _
    $region33: #{fnn_forward.2} parent=1 // pred_fallthru
      _
    // Predicated region
    $region34: #{fnn_forward.2} parent=1 // pred_check
      _
    $region35: #{fnn_forward.2} parent=1 // pred_check_branch
      %33 = sbr.rel (0) target = $region37
    $region36: #{fnn_forward.2} parent=1 // pred_region
      _
    $region37: #{fnn_forward.2} parent=1 // pred_fallthru
      _
    %v34 = vld [vmem:[%s8] sm:$0x3]
    %v35 = vlaneseq
    %v36 = vshrl.u32 %v35, 7
    %vm38 = vcmp.lt.s32.totalorder %v36, 2
    %v39 = vsel %vm38, %v34, %v15
    %v40 = vlaneseq
    %v41 = vand.u32 %v40, 127
    %vm43 = vcmp.lt.s32.totalorder %v41, 32
    %v44 = vsel %vm43, %v39, %v15
    %s46 = ssub.s32 256, 1
    %47 = vst [vmem:[#allocation7] sm:%s46] %v44
    %v48 = vld [vmem:[#allocation7] sm:$0xff]
    %v49 = vld [vmem:[%s0] sm:$0xff]
    %v50 = vld [vmem:[%s0 + $0x8] sm:$0xff]
    %v51 = vld [vmem:[%s0 + $0x10] sm:$0xff]
    %v52 = vld [vmem:[%s0 + $0x18] sm:$0xff]
    %v53 = vld [vmem:[%s1] sm:$0x1]
    %v55 = vlaneseq
    %v56 = vshrl.u32 %v55, 7
    %v57 = vsub.s32 0, %v56
    %v58 = vrot.slane %v53, %v57
    %vm60 = vcmask 261120
    %v62 = vsel %vm60, %v48, 0
    %64 = vmatprep.subr.mxu0 0.0
    %65 = vmatpush1.msra.mxu0 0.0
    %66 = vmatprep.subr.mxu0 0.0
    %67 = vmatpush1.msra.mxu0 0.0
    %68 = vmatprep.subr.mxu0 0.0
    %69 = vmatpush1.msra.mxu0 0.0
    %70 = vmatprep.subr.mxu0 0.0
    %71 = vmatpush1.msra.mxu0 0.0
    %72 = vmatprep.subr.mxu0 0.0
    %73 = vmatpush1.msra.mxu0 0.0
    %74 = vmatprep.subr.mxu0 0.0
    %75 = vmatpush1.msra.mxu0 0.0
    %76 = vmatprep.subr.mxu0 0.0
    %77 = vmatpush1.msra.mxu0 0.0
    %78 = vmatprep.subr.mxu0 0.0
    %79 = vmatpush1.msra.mxu0 0.0
    %80 = vmatprep.subr.mxu0 0.0
    %81 = vmatpush1.msra.mxu0 0.0
    %82 = vmatprep.subr.mxu0 0.0
    %83 = vmatpush1.msra.mxu0 0.0
    %84 = vmatprep.subr.mxu0 0.0
    %85 = vmatpush1.msra.mxu0 0.0
    %86 = vmatprep.subr.mxu0 0.0
    %87 = vmatpush1.msra.mxu0 0.0
    %88 = vmatprep.subr.mxu0 0.0
    %89 = vmatpush1.msra.mxu0 %v52
    %90 = vmatprep.subr.mxu0 0.0
    %91 = vmatpush1.msra.mxu0 %v51
    %92 = vmatprep.subr.mxu0 0.0
    %93 = vmatpush1.msra.mxu0 %v50
    %94 = vmatprep.subr.mxu0 0.0
    %95 = vmatpush1.msra.mxu0 %v49
    %96 = vmatprep.subr.mxu0 0.0
    %97 = vmatpush2.msra.mxu0 0.0
    %98 = vmatprep.subr.mxu0 0.0
    %99 = vmatpush2.msra.mxu0 0.0
    %100 = vmatprep.subr.mxu0 0.0
    %101 = vmatpush2.msra.mxu0 0.0
    %102 = vmatprep.subr.mxu0 0.0
    %103 = vmatpush2.msra.mxu0 0.0
    %104 = vmatprep.subr.mxu0 0.0
    %105 = vmatpush2.msra.mxu0 0.0
    %106 = vmatprep.subr.mxu0 0.0
    %107 = vmatpush2.msra.mxu0 0.0
    %108 = vmatprep.subr.mxu0 0.0
    %109 = vmatpush2.msra.mxu0 0.0
    %110 = vmatprep.subr.mxu0 0.0
    %111 = vmatpush2.msra.mxu0 0.0
    %112 = vmatprep.subr.mxu0 0.0
    %113 = vmatpush2.msra.mxu0 0.0
    %114 = vmatprep.subr.mxu0 0.0
    %115 = vmatpush2.msra.mxu0 0.0
    %116 = vmatprep.subr.mxu0 0.0
    %117 = vmatpush2.msra.mxu0 0.0
    %118 = vmatprep.subr.mxu0 0.0
    %119 = vmatpush2.msra.mxu0 0.0
    %120 = vmatprep.subr.mxu0 0.0
    %121 = vmatpush2.msra.mxu0 0.0
    %122 = vmatprep.subr.mxu0 0.0
    %123 = vmatpush2.msra.mxu0 0.0
    %124 = vmatprep.subr.mxu0 0.0
    %125 = vmatpush2.msra.mxu0 0.0
    %126 = vmatprep.subr.mxu0 0.0
    %127 = vmatpush2.msra.mxu0 0.0
    %128 = vmatprep.mubr.f32.mxu0 0.0
    %129 = vmatmul.mubr.f32.gmra.mxu0 %v62
    %v130 = vpop.f32.mrf.mxu0
    %v131 = vadd.f32 %v58, %v130
    %v132 = vpop.f32.mrf.mxu0
    %133 = vdwg.mxu0
    %v134 = vmul.f32 %v131, 0.5
    %v135 = vtanh.pop %v134
    %v136 = vmul.f32 %v135, 0.5
    %v137 = vadd.f32 %v136, 0.5
    %v138 = vld [vmem:[%s2] sm:$0xff]
    %v139 = vld [vmem:[%s2 + $0x8] sm:$0xff]
    %v140 = vld [vmem:[%s2 + $0x10] sm:$0xff]
    %v141 = vld [vmem:[%s2 + $0x18] sm:$0xff]
    %v142 = vld [vmem:[%s2 + $0x20] sm:$0xff]
    %v143 = vld [vmem:[%s2 + $0x28] sm:$0xff]
    %v144 = vld [vmem:[%s2 + $0x30] sm:$0xff]
    %v145 = vld [vmem:[%s2 + $0x38] sm:$0xff]
    %v146 = vld [vmem:[%s2 + $0x40] sm:$0xff]
    %v147 = vld [vmem:[%s2 + $0x48] sm:$0xff]
    %v148 = vld [vmem:[%s2 + $0x50] sm:$0xff]
    %v149 = vld [vmem:[%s2 + $0x58] sm:$0xff]
    %v150 = vld [vmem:[%s2 + $0x60] sm:$0xff]
    %v151 = vld [vmem:[%s2 + $0x68] sm:$0xff]
    %v152 = vld [vmem:[%s2 + $0x70] sm:$0xff]
    %v153 = vld [vmem:[%s2 + $0x78] sm:$0xff]
    %v154 = vld [vmem:[%s3] sm:$0x1]
    %v156 = vlaneseq
    %v157 = vshrl.u32 %v156, 7
    %v158 = vsub.s32 0, %v157
    %v159 = vrot.slane %v154, %v158
    %161 = vmatprep.subr.mxu0 0.0
    %162 = vmatpush1.msra.mxu0 %v153
    %163 = vmatprep.subr.mxu0 0.0
    %164 = vmatpush1.msra.mxu0 %v152
    %165 = vmatprep.subr.mxu0 0.0
    %166 = vmatpush1.msra.mxu0 %v151
    %167 = vmatprep.subr.mxu0 0.0
    %168 = vmatpush1.msra.mxu0 %v150
    %169 = vmatprep.subr.mxu0 0.0
    %170 = vmatpush1.msra.mxu0 %v149
    %171 = vmatprep.subr.mxu0 0.0
    %172 = vmatpush1.msra.mxu0 %v148
    %173 = vmatprep.subr.mxu0 0.0
    %174 = vmatpush1.msra.mxu0 %v147
    %175 = vmatprep.subr.mxu0 0.0
    %176 = vmatpush1.msra.mxu0 %v146
    %177 = vmatprep.subr.mxu0 0.0
    %178 = vmatpush1.msra.mxu0 %v145
    %179 = vmatprep.subr.mxu0 0.0
    %180 = vmatpush1.msra.mxu0 %v144
    %181 = vmatprep.subr.mxu0 0.0
    %182 = vmatpush1.msra.mxu0 %v143
    %183 = vmatprep.subr.mxu0 0.0
    %184 = vmatpush1.msra.mxu0 %v142
    %185 = vmatprep.subr.mxu0 0.0
    %186 = vmatpush1.msra.mxu0 %v141
    %187 = vmatprep.subr.mxu0 0.0
    %188 = vmatpush1.msra.mxu0 %v140
    %189 = vmatprep.subr.mxu0 0.0
    %190 = vmatpush1.msra.mxu0 %v139
    %191 = vmatprep.subr.mxu0 0.0
    %192 = vmatpush1.msra.mxu0 %v138
    %193 = vmatprep.subr.mxu0 0.0
    %194 = vmatpush2.msra.mxu0 0.0
    %195 = vmatprep.subr.mxu0 0.0
    %196 = vmatpush2.msra.mxu0 0.0
    %197 = vmatprep.subr.mxu0 0.0
    %198 = vmatpush2.msra.mxu0 0.0
    %199 = vmatprep.subr.mxu0 0.0
    %200 = vmatpush2.msra.mxu0 0.0
    %201 = vmatprep.subr.mxu0 0.0
    %202 = vmatpush2.msra.mxu0 0.0
    %203 = vmatprep.subr.mxu0 0.0
    %204 = vmatpush2.msra.mxu0 0.0
    %205 = vmatprep.subr.mxu0 0.0
    %206 = vmatpush2.msra.mxu0 0.0
    %207 = vmatprep.subr.mxu0 0.0
    %208 = vmatpush2.msra.mxu0 0.0
    %209 = vmatprep.subr.mxu0 0.0
    %210 = vmatpush2.msra.mxu0 0.0
    %211 = vmatprep.subr.mxu0 0.0
    %212 = vmatpush2.msra.mxu0 0.0
    %213 = vmatprep.subr.mxu0 0.0
    %214 = vmatpush2.msra.mxu0 0.0
    %215 = vmatprep.subr.mxu0 0.0
    %216 = vmatpush2.msra.mxu0 0.0
    %217 = vmatprep.subr.mxu0 0.0
    %218 = vmatpush2.msra.mxu0 0.0
    %219 = vmatprep.subr.mxu0 0.0
    %220 = vmatpush2.msra.mxu0 0.0
    %221 = vmatprep.subr.mxu0 0.0
    %222 = vmatpush2.msra.mxu0 0.0
    %223 = vmatprep.subr.mxu0 0.0
    %224 = vmatpush2.msra.mxu0 0.0
    %225 = vmatprep.mubr.f32.mxu0 0.0
    %226 = vmatmul.mubr.f32.gmra.mxu0 %v137
    %v227 = vpop.f32.mrf.mxu0
    %v228 = vadd.f32 %v159, %v227
    %v229 = vpop.f32.mrf.mxu0
    %230 = vdwg.mxu0
    %v231 = vmul.f32 %v228, 0.5
    %v232 = vtanh.pop %v231
    %v233 = vmul.f32 %v232, 0.5
    %v234 = vadd.f32 %v233, 0.5
    %v235 = vld [vmem:[%s4] sm:$0xff]
    %v236 = vld [vmem:[%s4 + $0x8] sm:$0xff]
    %v237 = vld [vmem:[%s4 + $0x10] sm:$0xff]
    %v238 = vld [vmem:[%s4 + $0x18] sm:$0xff]
    %v239 = vld [vmem:[%s4 + $0x20] sm:$0xff]
    %v240 = vld [vmem:[%s4 + $0x28] sm:$0xff]
    %v241 = vld [vmem:[%s4 + $0x30] sm:$0xff]
    %v242 = vld [vmem:[%s4 + $0x38] sm:$0xff]
    %v243 = vld [vmem:[%s4 + $0x40] sm:$0xff]
    %v244 = vld [vmem:[%s4 + $0x48] sm:$0xff]
    %v245 = vld [vmem:[%s4 + $0x50] sm:$0xff]
    %v246 = vld [vmem:[%s4 + $0x58] sm:$0xff]
    %v247 = vld [vmem:[%s4 + $0x60] sm:$0xff]
    %v248 = vld [vmem:[%s4 + $0x68] sm:$0xff]
    %v249 = vld [vmem:[%s4 + $0x70] sm:$0xff]
    %v250 = vld [vmem:[%s4 + $0x78] sm:$0xff]
    %v251 = vld [vmem:[%s5] sm:$0x1]
    %v253 = vlaneseq
    %v254 = vshrl.u32 %v253, 7
    %v255 = vsub.s32 0, %v254
    %v256 = vrot.slane %v251, %v255
    %258 = vmatprep.subr.mxu0 0.0
    %259 = vmatpush1.msra.mxu0 %v250
    %260 = vmatprep.subr.mxu0 0.0
    %261 = vmatpush1.msra.mxu0 %v249
    %262 = vmatprep.subr.mxu0 0.0
    %263 = vmatpush1.msra.mxu0 %v248
    %264 = vmatprep.subr.mxu0 0.0
    %265 = vmatpush1.msra.mxu0 %v247
    %266 = vmatprep.subr.mxu0 0.0
    %267 = vmatpush1.msra.mxu0 %v246
    %268 = vmatprep.subr.mxu0 0.0
    %269 = vmatpush1.msra.mxu0 %v245
    %270 = vmatprep.subr.mxu0 0.0
    %271 = vmatpush1.msra.mxu0 %v244
    %272 = vmatprep.subr.mxu0 0.0
    %273 = vmatpush1.msra.mxu0 %v243
    %274 = vmatprep.subr.mxu0 0.0
    %275 = vmatpush1.msra.mxu0 %v242
    %276 = vmatprep.subr.mxu0 0.0
    %277 = vmatpush1.msra.mxu0 %v241
    %278 = vmatprep.subr.mxu0 0.0
    %279 = vmatpush1.msra.mxu0 %v240
    %280 = vmatprep.subr.mxu0 0.0
    %281 = vmatpush1.msra.mxu0 %v239
    %282 = vmatprep.subr.mxu0 0.0
    %283 = vmatpush1.msra.mxu0 %v238
    %284 = vmatprep.subr.mxu0 0.0
    %285 = vmatpush1.msra.mxu0 %v237
    %286 = vmatprep.subr.mxu0 0.0
    %287 = vmatpush1.msra.mxu0 %v236
    %288 = vmatprep.subr.mxu0 0.0
    %289 = vmatpush1.msra.mxu0 %v235
    %290 = vmatprep.subr.mxu0 0.0
    %291 = vmatpush2.msra.mxu0 0.0
    %292 = vmatprep.subr.mxu0 0.0
    %293 = vmatpush2.msra.mxu0 0.0
    %294 = vmatprep.subr.mxu0 0.0
    %295 = vmatpush2.msra.mxu0 0.0
    %296 = vmatprep.subr.mxu0 0.0
    %297 = vmatpush2.msra.mxu0 0.0
    %298 = vmatprep.subr.mxu0 0.0
    %299 = vmatpush2.msra.mxu0 0.0
    %300 = vmatprep.subr.mxu0 0.0
    %301 = vmatpush2.msra.mxu0 0.0
    %302 = vmatprep.subr.mxu0 0.0
    %303 = vmatpush2.msra.mxu0 0.0
    %304 = vmatprep.subr.mxu0 0.0
    %305 = vmatpush2.msra.mxu0 0.0
    %306 = vmatprep.subr.mxu0 0.0
    %307 = vmatpush2.msra.mxu0 0.0
    %308 = vmatprep.subr.mxu0 0.0
    %309 = vmatpush2.msra.mxu0 0.0
    %310 = vmatprep.subr.mxu0 0.0
    %311 = vmatpush2.msra.mxu0 0.0
    %312 = vmatprep.subr.mxu0 0.0
    %313 = vmatpush2.msra.mxu0 0.0
    %314 = vmatprep.subr.mxu0 0.0
    %315 = vmatpush2.msra.mxu0 0.0
    %316 = vmatprep.subr.mxu0 0.0
    %317 = vmatpush2.msra.mxu0 0.0
    %318 = vmatprep.subr.mxu0 0.0
    %319 = vmatpush2.msra.mxu0 0.0
    %320 = vmatprep.subr.mxu0 0.0
    %321 = vmatpush2.msra.mxu0 0.0
    %322 = vmatprep.mubr.f32.mxu0 0.0
    %323 = vmatmul.mubr.f32.gmra.mxu0 %v234
    %v324 = vpop.f32.mrf.mxu0
    %v325 = vadd.f32 %v256, %v324
    %v326 = vpop.f32.mrf.mxu0
    %327 = vdwg.mxu0
    %v328 = vmul.f32 %v325, 0.5
    %v329 = vtanh.pop %v328
    %v330 = vmul.f32 %v329, 0.5
    %v331 = vadd.f32 %v330, 0.5
    %v332 = vld [vmem:[%s6] sm:$0xff]
    %v333 = vld [vmem:[%s6 + $0x8] sm:$0xff]
    %v334 = vld [vmem:[%s6 + $0x10] sm:$0xff]
    %v335 = vld [vmem:[%s6 + $0x18] sm:$0xff]
    %v336 = vld [vmem:[%s6 + $0x20] sm:$0xff]
    %v337 = vld [vmem:[%s6 + $0x28] sm:$0xff]
    %v338 = vld [vmem:[%s6 + $0x30] sm:$0xff]
    %v339 = vld [vmem:[%s6 + $0x38] sm:$0xff]
    %v340 = vld [vmem:[%s6 + $0x40] sm:$0xff]
    %v341 = vld [vmem:[%s6 + $0x48] sm:$0xff]
    %v342 = vld [vmem:[%s6 + $0x50] sm:$0xff]
    %v343 = vld [vmem:[%s6 + $0x58] sm:$0xff]
    %v344 = vld [vmem:[%s6 + $0x60] sm:$0xff]
    %v345 = vld [vmem:[%s6 + $0x68] sm:$0xff]
    %v346 = vld [vmem:[%s6 + $0x70] sm:$0xff]
    %v347 = vld [vmem:[%s6 + $0x78] sm:$0xff]
    %v348 = vld [vmem:[%s7] sm:$0x1]
    %v350 = vlaneseq
    %v351 = vshrl.u32 %v350, 7
    %v352 = vsub.s32 0, %v351
    %v353 = vrot.slane %v348, %v352
    %355 = vmatprep.subr.mxu0 0.0
    %356 = vmatpush1.msra.mxu0 %v347
    %357 = vmatprep.subr.mxu0 0.0
    %358 = vmatpush1.msra.mxu0 %v346
    %359 = vmatprep.subr.mxu0 0.0
    %360 = vmatpush1.msra.mxu0 %v345
    %361 = vmatprep.subr.mxu0 0.0
    %362 = vmatpush1.msra.mxu0 %v344
    %363 = vmatprep.subr.mxu0 0.0
    %364 = vmatpush1.msra.mxu0 %v343
    %365 = vmatprep.subr.mxu0 0.0
    %366 = vmatpush1.msra.mxu0 %v342
    %367 = vmatprep.subr.mxu0 0.0
    %368 = vmatpush1.msra.mxu0 %v341
    %369 = vmatprep.subr.mxu0 0.0
    %370 = vmatpush1.msra.mxu0 %v340
    %371 = vmatprep.subr.mxu0 0.0
    %372 = vmatpush1.msra.mxu0 %v339
    %373 = vmatprep.subr.mxu0 0.0
    %374 = vmatpush1.msra.mxu0 %v338
    %375 = vmatprep.subr.mxu0 0.0
    %376 = vmatpush1.msra.mxu0 %v337
    %377 = vmatprep.subr.mxu0 0.0
    %378 = vmatpush1.msra.mxu0 %v336
    %379 = vmatprep.subr.mxu0 0.0
    %380 = vmatpush1.msra.mxu0 %v335
    %381 = vmatprep.subr.mxu0 0.0
    %382 = vmatpush1.msra.mxu0 %v334
    %383 = vmatprep.subr.mxu0 0.0
    %384 = vmatpush1.msra.mxu0 %v333
    %385 = vmatprep.subr.mxu0 0.0
    %386 = vmatpush1.msra.mxu0 %v332
    %387 = vmatprep.subr.mxu0 0.0
    %388 = vmatpush2.msra.mxu0 0.0
    %389 = vmatprep.subr.mxu0 0.0
    %390 = vmatpush2.msra.mxu0 0.0
    %391 = vmatprep.subr.mxu0 0.0
    %392 = vmatpush2.msra.mxu0 0.0
    %393 = vmatprep.subr.mxu0 0.0
    %394 = vmatpush2.msra.mxu0 0.0
    %395 = vmatprep.subr.mxu0 0.0
    %396 = vmatpush2.msra.mxu0 0.0
    %397 = vmatprep.subr.mxu0 0.0
    %398 = vmatpush2.msra.mxu0 0.0
    %399 = vmatprep.subr.mxu0 0.0
    %400 = vmatpush2.msra.mxu0 0.0
    %401 = vmatprep.subr.mxu0 0.0
    %402 = vmatpush2.msra.mxu0 0.0
    %403 = vmatprep.subr.mxu0 0.0
    %404 = vmatpush2.msra.mxu0 0.0
    %405 = vmatprep.subr.mxu0 0.0
    %406 = vmatpush2.msra.mxu0 0.0
    %407 = vmatprep.subr.mxu0 0.0
    %408 = vmatpush2.msra.mxu0 0.0
    %409 = vmatprep.subr.mxu0 0.0
    %410 = vmatpush2.msra.mxu0 0.0
    %411 = vmatprep.subr.mxu0 0.0
    %412 = vmatpush2.msra.mxu0 0.0
    %413 = vmatprep.subr.mxu0 0.0
    %414 = vmatpush2.msra.mxu0 0.0
    %415 = vmatprep.subr.mxu0 0.0
    %416 = vmatpush2.msra.mxu0 0.0
    %417 = vmatprep.subr.mxu0 0.0
    %418 = vmatpush2.msra.mxu0 0.0
    %419 = vmatprep.mubr.f32.mxu0 0.0
    %420 = vmatmul.mubr.f32.gmra.mxu0 %v331
    %v421 = vpop.f32.mrf.mxu0
    %v422 = vadd.f32 %v353, %v421
    %v423 = vpop.f32.mrf.mxu0
    %424 = vdwg.mxu0
    %v425 = vlaneseq
    %v426 = vand.u32 %v425, 127
    %vm427 = vcmp.lt.s32.totalorder %v426, 64
    %v428 = vsel %vm427, %v137, %v422
    %429 = vst [vmem:[%s10] sm:$0xff] %v428
    // Predicated region
    $region38: #{fnn_forward.2} parent=1 // pred_check
      _
    $region39: #{fnn_forward.2} parent=1 // pred_check_branch
      %431 = sbr.rel (0) target = $region41
    $region40: #{fnn_forward.2} parent=1 // pred_region
      _
    $region41: #{fnn_forward.2} parent=1 // pred_fallthru
      _
    // Predicated region
    $region42: #{fnn_forward.2} parent=1 // pred_check
      _
    $region43: #{fnn_forward.2} parent=1 // pred_check_branch
      %433 = sbr.rel (0) target = $region45
    $region44: #{fnn_forward.2} parent=1 // pred_region
      _
    $region45: #{fnn_forward.2} parent=1 // pred_fallthru
      _

</llo_original>
